<compile_context>
chip_gen: v6e
topology: v6e:2x2x1
jax: 0.10.0
libtpu: 0.0.40
codegen_flags: <defaults>
</compile_context>

<pallas_src>
import jax
import jax.numpy as jnp
import numpy as np
from jax.experimental import pallas as pl
from jax.experimental.pallas import tpu as pltpu


def _round_up(x, m):
    return (x + m - 1) // m * m


def _attention_kernel(x_ref, ctx_ref, w_in_ref, b_in_ref, w_c_ref, b_c_ref,
                      v_ref, hid_ref, alpha_ref):
    tb, s, dp = ctx_ref.shape
    hp = w_in_ref.shape[1]

    x = x_ref[...]                        # (TB, Dp)   decoder hidden states
    ctx = ctx_ref[...]                    # (TB, S, Dp) encoder context

    # inp = input_linear(input)                        -> (TB, Hp)      (MXU)
    inp_proj = jnp.dot(x, w_in_ref[...],
                       preferred_element_type=jnp.float32) + b_in_ref[...]

    # ctx = context_linear(context) (1x1 conv == linear), batched as one matmul:
    #   (TB*S, Dp) @ (Dp, Hp)                          -> (TB, S, Hp)   (MXU)
    ctx2 = ctx.reshape(tb * s, dp)
    ctx_proj = (jnp.dot(ctx2, w_c_ref[...],
                        preferred_element_type=jnp.float32)
                + b_c_ref[...]).reshape(tb, s, hp)

    # att[b, s] = sum_h V[h] * tanh(inp + ctx)[b, s, h]
    # (EUP tanh, VPU multiply, XLU cross-lane reduce -- keeps the MXU free)
    t = jnp.tanh(ctx_proj + inp_proj[:, None, :])          # (TB, S, Hp)
    att = jnp.sum(t * v_ref[...].reshape(1, 1, hp), axis=-1)   # (TB, S)

    # softmax over the sequence dimension
    m = jnp.max(att, axis=-1, keepdims=True)
    e = jnp.exp(att - m)
    alpha = e / jnp.sum(e, axis=-1, keepdims=True)          # (TB, S)

    # hidden_state[b, h] = sum_s ctx_proj[b, s, h] * alpha[b, s]
    # (VPU multiply + sublane reduce instead of a K=S batched matmul)
    hid = jnp.sum(ctx_proj * alpha[:, :, None], axis=1)     # (TB, Hp)

    hid_ref[...] = hid.astype(hid_ref.dtype)
    alpha_ref[...] = alpha.astype(alpha_ref.dtype)


def attention_forward(inputs, context, mask, params, *, block_b=None):
    # `mask` accepted for signature parity with the PyTorch module; the
    # reference forward never reads it.
    del mask
    B, D = inputs.shape
    S = context.shape[1]
    H = params["w_in"].shape[0]
    out_dtype = inputs.dtype
    f32 = jnp.float32

    # Pad feature dims to the 128-lane width (zero padding is exact: padded
    # weight rows/cols, biases and V entries are zero, so results are unchanged
    # and the extra output columns are sliced off below).
    Dp = _round_up(D, 128)
    Hp = _round_up(H, 128)

    # Batch tile: a multiple of 8 sublanes, capped so the double-buffered
    # (TB, S, Dp) context tile stays well inside v7x's 64 MiB VMEM.
    if block_b is None:
        bytes_per_row = 4 * (S * Dp + Dp + Hp + S)
        block_b = max(8, min(512, (8 * 1024 * 1024) // max(bytes_per_row, 1)))
    block_b = _round_up(min(block_b, _round_up(B, 8)), 8)
    Bp = _round_up(B, block_b)
    grid_b = Bp // block_b

    x_p = jnp.pad(inputs.astype(f32), ((0, Bp - B), (0, Dp - D)))
    ctx_p = jnp.pad(context.astype(f32), ((0, Bp - B), (0, 0), (0, Dp - D)))
    w_in_p = jnp.pad(params["w_in"].T.astype(f32), ((0, Dp - D), (0, Hp - H)))
    w_c_p = jnp.pad(params["w_c"].T.astype(f32), ((0, Dp - D), (0, Hp - H)))
    b_in_p = jnp.pad(params["b_in"].astype(f32), (0, Hp - H)).reshape(1, Hp)
    b_c_p = jnp.pad(params["b_c"].astype(f32), (0, Hp - H)).reshape(1, Hp)
    v_p = jnp.pad(params["v"].astype(f32), (0, Hp - H)).reshape(1, Hp)

    cost = pl.CostEstimate(
        flops=int(2 * B * S * D * H + 2 * B * D * H + 4 * B * S * H),
        transcendentals=int(B * S * H + B * S),
        bytes_accessed=int(4 * (B * D + B * S * D + 2 * D * H + 3 * H
                                + B * H + B * S)),
    )

    hid, alpha = pl.pallas_call(
        _attention_kernel,
        out_shape=(
            jax.ShapeDtypeStruct((Bp, Hp), f32),
            jax.ShapeDtypeStruct((Bp, S), f32),
        ),
        grid_spec=pltpu.PrefetchScalarGridSpec(
            num_scalar_prefetch=0,
            grid=(grid_b,),
            in_specs=[
                pl.BlockSpec((block_b, Dp), lambda b: (b, 0)),        # input rows
                pl.BlockSpec((block_b, S, Dp), lambda b: (b, 0, 0)),  # context slab
                pl.BlockSpec((Dp, Hp), lambda b: (0, 0)),             # W_in^T
                pl.BlockSpec((1, Hp), lambda b: (0, 0)),              # b_in
                pl.BlockSpec((Dp, Hp), lambda b: (0, 0)),             # W_ctx^T (1x1 conv)
                pl.BlockSpec((1, Hp), lambda b: (0, 0)),              # b_ctx
                pl.BlockSpec((1, Hp), lambda b: (0, 0)),              # V
            ],
            out_specs=(
                pl.BlockSpec((block_b, Hp), lambda b: (b, 0)),        # hidden_state
                pl.BlockSpec((block_b, S), lambda b: (b, 0)),         # alpha
            ),
        ),
        compiler_params=pltpu.CompilerParams(
            dimension_semantics=("parallel",)),
        cost_estimate=cost,
    )(x_p, ctx_p, w_in_p, b_in_p, w_c_p, b_c_p, v_p)

    return hid[:B, :H].astype(out_dtype), alpha[:B, :S].astype(out_dtype)


def attention_ref(inputs, context, params):
    """Plain-JAX reference mirroring the PyTorch forward."""
    inp = inputs @ params["w_in"].T + params["b_in"]                       # (B, H)
    ctx = jnp.einsum("hd,bsd->bhs", params["w_c"], context) \
        + params["b_c"][None, :, None]                                     # (B, H, S)
    t = jnp.tanh(ctx + inp[:, :, None])
    att = jnp.einsum("h,bhs->bs", params["v"], t)
    alpha = jax.nn.softmax(att, axis=1)
    hidden = jnp.einsum("bhs,bs->bh", ctx, alpha)
    return hidden, alpha


def init_params(key, input_dim, hidden_dim):
    k1, k2, k3, k4, k5 = jax.random.split(key, 5)
    bound_in = 1.0 / np.sqrt(input_dim)
    return {
        # nn.Linear(input_dim, hidden_dim): weight (H, D), bias (H,)
        "w_in": jax.random.uniform(k1, (hidden_dim, input_dim), jnp.float32,
                                   -bound_in, bound_in),
        "b_in": jax.random.uniform(k2, (hidden_dim,), jnp.float32,
                                   -bound_in, bound_in),
        # nn.Conv1d(input_dim, hidden_dim, 1): weight (H, D, 1) -> (H, D), bias (H,)
        "w_c": jax.random.uniform(k3, (hidden_dim, input_dim), jnp.float32,
                                  -bound_in, bound_in),
        "b_c": jax.random.uniform(k4, (hidden_dim,), jnp.float32,
                                  -bound_in, bound_in),
        # V ~ U(-1, 1)
        "v": jax.random.uniform(k5, (hidden_dim,), jnp.float32, -1.0, 1.0),
    }


if __name__ == "__main__":
    B, S, D_IN, HID = 2, 8, 32, 32

    key = jax.random.PRNGKey(0)
    kp, kx, kc = jax.random.split(key, 3)
    params = init_params(kp, D_IN, HID)

    inputs = jax.random.normal(kx, (B, D_IN), jnp.float32)       # hidden state h
    context = jax.random.normal(kc, (B, S, D_IN), jnp.float32)   # encoder outputs
    mask = jnp.ones((B, S), jnp.bool_)                            # unused in forward

    hidden_state, alpha = attention_forward(inputs, context, mask, params)
    jax.block_until_ready((hidden_state, alpha))

    hidden_ref, alpha_ref_ = attention_ref(inputs, context, params)
    assert hidden_state.shape == (B, HID) and alpha.shape == (B, S)
    np.testing.assert_allclose(np.asarray(hidden_state), np.asarray(hidden_ref),
                               rtol=1e-5, atol=1e-5)
    np.testing.assert_allclose(np.asarray(alpha), np.asarray(alpha_ref_),
                               rtol=1e-5, atol=1e-5)

    print("KERNEL_OK")
</pallas_src>

<mosaic_0001>
module attributes {stable_mosaic.version = 11 : i64} {
  func.func @_attention_kernel(%arg0: i32, %arg1: memref<8x128xf32, #tpu.memory_space<vmem>>, %arg2: memref<8x8x128xf32, #tpu.memory_space<vmem>>, %arg3: memref<128x128xf32, #tpu.memory_space<vmem>>, %arg4: memref<1x128xf32, #tpu.memory_space<vmem>>, %arg5: memref<128x128xf32, #tpu.memory_space<vmem>>, %arg6: memref<1x128xf32, #tpu.memory_space<vmem>>, %arg7: memref<1x128xf32, #tpu.memory_space<vmem>>, %arg8: memref<8x128xf32, #tpu.memory_space<vmem>>, %arg9: memref<8x8xf32, #tpu.memory_space<vmem>>) attributes {dimension_semantics = [#tpu.dimension_semantics<parallel>], iteration_bounds = array<i64: 1>, scalar_prefetch = 0 : i64, scratch_operands = 0 : i64, tpu.core_type = #tpu.core_type<tc>, window_params = [{transform_indices = @transform_0, window_bounds = array<i64: 8, 128>}, {transform_indices = @transform_1, window_bounds = array<i64: 8, 8, 128>}, {pipeline_mode = #tpu.pipeline_mode<synchronous>, transform_indices = @transform_2, window_bounds = array<i64: 128, 128>}, {pipeline_mode = #tpu.pipeline_mode<synchronous>, transform_indices = @transform_3, window_bounds = array<i64: 1, 128>}, {pipeline_mode = #tpu.pipeline_mode<synchronous>, transform_indices = @transform_4, window_bounds = array<i64: 128, 128>}, {pipeline_mode = #tpu.pipeline_mode<synchronous>, transform_indices = @transform_5, window_bounds = array<i64: 1, 128>}, {pipeline_mode = #tpu.pipeline_mode<synchronous>, transform_indices = @transform_6, window_bounds = array<i64: 1, 128>}, {transform_indices = @transform_7, window_bounds = array<i64: 8, 128>}, {transform_indices = @transform_8, window_bounds = array<i64: 8, 8>}]} {
    %c0 = arith.constant 0 : index
    %c0_0 = arith.constant 0 : index
    %0 = vector.load %arg1[%c0, %c0_0] : memref<8x128xf32, #tpu.memory_space<vmem>>, vector<8x128xf32>
    %c0_1 = arith.constant 0 : index
    %c0_2 = arith.constant 0 : index
    %c0_3 = arith.constant 0 : index
    %1 = vector.load %arg2[%c0_1, %c0_2, %c0_3] : memref<8x8x128xf32, #tpu.memory_space<vmem>>, vector<8x8x128xf32>
    %c0_4 = arith.constant 0 : index
    %c0_5 = arith.constant 0 : index
    %2 = vector.load %arg3[%c0_4, %c0_5] : memref<128x128xf32, #tpu.memory_space<vmem>>, vector<128x128xf32>
    %cst = arith.constant dense<0.000000e+00> : vector<8x128xf32>
    %3 = tpu.matmul %0, %2, %cst {dimension_numbers = #tpu.dot_dimension_numbers<[1], [0], [0], [1], [0, 0, 1, 1], [], []>} : vector<8x128xf32>, vector<128x128xf32>, vector<8x128xf32> -> vector<8x128xf32>
    %c0_6 = arith.constant 0 : index
    %c0_7 = arith.constant 0 : index
    %4 = vector.load %arg4[%c0_6, %c0_7] : memref<1x128xf32, #tpu.memory_space<vmem>>, vector<1x128xf32>
    %5 = vector.broadcast %4 : vector<1x128xf32> to vector<8x128xf32>
    %6 = arith.addf %3, %5 : vector<8x128xf32>
    %7 = vector.shape_cast %1 : vector<8x8x128xf32> to vector<64x128xf32>
    %c0_8 = arith.constant 0 : index
    %c0_9 = arith.constant 0 : index
    %8 = vector.load %arg5[%c0_8, %c0_9] : memref<128x128xf32, #tpu.memory_space<vmem>>, vector<128x128xf32>
    %cst_10 = arith.constant dense<0.000000e+00> : vector<64x128xf32>
    %9 = tpu.matmul %7, %8, %cst_10 {dimension_numbers = #tpu.dot_dimension_numbers<[1], [0], [0], [1], [0, 0, 1, 1], [], []>} : vector<64x128xf32>, vector<128x128xf32>, vector<64x128xf32> -> vector<64x128xf32>
    %c0_11 = arith.constant 0 : index
    %c0_12 = arith.constant 0 : index
    %10 = vector.load %arg6[%c0_11, %c0_12] : memref<1x128xf32, #tpu.memory_space<vmem>>, vector<1x128xf32>
    %11 = vector.broadcast %10 : vector<1x128xf32> to vector<64x128xf32>
    %12 = arith.addf %9, %11 : vector<64x128xf32>
    %13 = vector.shape_cast %12 : vector<64x128xf32> to vector<8x8x128xf32>
    %14 = vector.shape_cast %6 : vector<8x128xf32> to vector<8x1x128xf32>
    %15 = vector.broadcast %14 : vector<8x1x128xf32> to vector<8x8x128xf32>
    %16 = arith.addf %13, %15 : vector<8x8x128xf32>
    %17 = math.tanh %16 : vector<8x8x128xf32>
    %c0_13 = arith.constant 0 : index
    %c0_14 = arith.constant 0 : index
    %18 = vector.load %arg7[%c0_13, %c0_14] : memref<1x128xf32, #tpu.memory_space<vmem>>, vector<1x128xf32>
    %19 = vector.shape_cast %18 : vector<1x128xf32> to vector<1x1x128xf32>
    %20 = vector.broadcast %19 : vector<1x1x128xf32> to vector<8x8x128xf32>
    %21 = arith.mulf %17, %20 : vector<8x8x128xf32>
    %cst_15 = arith.constant dense<0.000000e+00> : vector<8x8xf32>
    %22 = vector.multi_reduction <add>, %21, %cst_15 [2] : vector<8x8x128xf32> to vector<8x8xf32>
    %cst_16 = arith.constant dense<0xFF800000> : vector<8xf32>
    %23 = vector.multi_reduction <maximumf>, %22, %cst_16 [1] : vector<8x8xf32> to vector<8xf32>
    %24 = vector.shape_cast %23 : vector<8xf32> to vector<8x1xf32>
    %25 = vector.broadcast %24 : vector<8x1xf32> to vector<8x8xf32>
    %26 = arith.subf %22, %25 : vector<8x8xf32>
    %27 = math.exp %26 : vector<8x8xf32>
    %cst_17 = arith.constant dense<0.000000e+00> : vector<8xf32>
    %28 = vector.multi_reduction <add>, %27, %cst_17 [1] : vector<8x8xf32> to vector<8xf32>
    %29 = vector.shape_cast %28 : vector<8xf32> to vector<8x1xf32>
    %30 = vector.broadcast %29 : vector<8x1xf32> to vector<8x8xf32>
    %31 = arith.divf %27, %30 : vector<8x8xf32>
    %32 = vector.shape_cast %31 : vector<8x8xf32> to vector<8x8x1xf32>
    %33 = vector.broadcast %32 : vector<8x8x1xf32> to vector<8x8x128xf32>
    %34 = arith.mulf %13, %33 : vector<8x8x128xf32>
    %cst_18 = arith.constant dense<0.000000e+00> : vector<8x128xf32>
    %35 = vector.multi_reduction <add>, %34, %cst_18 [1] : vector<8x8x128xf32> to vector<8x128xf32>
    %c0_19 = arith.constant 0 : index
    %c0_20 = arith.constant 0 : index
    %36 = vector.load %arg8[%c0_19, %c0_20] : memref<8x128xf32, #tpu.memory_space<vmem>>, vector<8x128xf32>
    tpu.vector_store %arg8[%c0_19, %c0_20], %35 {strides = array<i32>} : memref<8x128xf32, #tpu.memory_space<vmem>>, vector<8x128xf32>,
    %c0_21 = arith.constant 0 : index
    %c0_22 = arith.constant 0 : index
    %37 = vector.load %arg9[%c0_21, %c0_22] : memref<8x8xf32, #tpu.memory_space<vmem>>, vector<8x8xf32>
    tpu.vector_store %arg9[%c0_21, %c0_22], %31 {strides = array<i32>} : memref<8x8xf32, #tpu.memory_space<vmem>>, vector<8x8xf32>,
    return
  }
  func.func @transform_0(%arg0: i32) -> (i32, i32) {
    %c0_i32 = arith.constant 0 : i32
    %c0_i32_0 = arith.constant 0 : i32
    return %arg0, %c0_i32 : i32, i32
  }
  func.func @transform_1(%arg0: i32) -> (i32, i32, i32) {
    %c0_i32 = arith.constant 0 : i32
    %c0_i32_0 = arith.constant 0 : i32
    %c0_i32_1 = arith.constant 0 : i32
    return %arg0, %c0_i32, %c0_i32_0 : i32, i32, i32
  }
  func.func @transform_2(%arg0: i32) -> (i32, i32) {
    %c0_i32 = arith.constant 0 : i32
    %c0_i32_0 = arith.constant 0 : i32
    %c0_i32_1 = arith.constant 0 : i32
    return %c0_i32, %c0_i32_0 : i32, i32
  }
  func.func @transform_3(%arg0: i32) -> (i32, i32) {
    %c0_i32 = arith.constant 0 : i32
    %c0_i32_0 = arith.constant 0 : i32
    %c0_i32_1 = arith.constant 0 : i32
    return %c0_i32, %c0_i32_0 : i32, i32
  }
  func.func @transform_4(%arg0: i32) -> (i32, i32) {
    %c0_i32 = arith.constant 0 : i32
    %c0_i32_0 = arith.constant 0 : i32
    %c0_i32_1 = arith.constant 0 : i32
    return %c0_i32, %c0_i32_0 : i32, i32
  }
  func.func @transform_5(%arg0: i32) -> (i32, i32) {
    %c0_i32 = arith.constant 0 : i32
    %c0_i32_0 = arith.constant 0 : i32
    %c0_i32_1 = arith.constant 0 : i32
    return %c0_i32, %c0_i32_0 : i32, i32
  }
  func.func @transform_6(%arg0: i32) -> (i32, i32) {
    %c0_i32 = arith.constant 0 : i32
    %c0_i32_0 = arith.constant 0 : i32
    %c0_i32_1 = arith.constant 0 : i32
    return %c0_i32, %c0_i32_0 : i32, i32
  }
  func.func @transform_7(%arg0: i32) -> (i32, i32) {
    %c0_i32 = arith.constant 0 : i32
    %c0_i32_0 = arith.constant 0 : i32
    return %arg0, %c0_i32 : i32, i32
  }
  func.func @transform_8(%arg0: i32) -> (i32, i32) {
    %c0_i32 = arith.constant 0 : i32
    %c0_i32_0 = arith.constant 0 : i32
    return %arg0, %c0_i32 : i32, i32
  }
}

</mosaic_0001>

<llo_original>
// kernel: tpu_custom_call.1
$region0: #{tpu_custom_call.1}
  #allocation0 [shape = 'u32[]', space=smem, size = 0x4, offset = 0x4, fixed_abs, tag = 'smem constant byte address 0x4 - core index']
  #allocation1 [shape = 'u32[144,128]{1,0:T(1,128)}', space=vmem, size = 0x12000, scoped, tag = 'internal scratch']
  %s0 = inlined_call_operand.hbm [shape: f32[8,128], index: 0, kind: input, shape index: {}]
  %s1 = inlined_call_operand.hbm [shape: f32[8,8,128], index: 1, kind: input, shape index: {}]
  %s2 = inlined_call_operand.hbm [shape: f32[128,128], index: 2, kind: input, shape index: {}]
  %s3 = inlined_call_operand.vmem [shape: f32[1,128], index: 3, kind: input, shape index: {}]
  %s4 = inlined_call_operand.hbm [shape: f32[128,128], index: 4, kind: input, shape index: {}]
  %s5 = inlined_call_operand.vmem [shape: f32[1,128], index: 5, kind: input, shape index: {}]
  %s6 = inlined_call_operand.vmem [shape: f32[1,128], index: 6, kind: input, shape index: {}]
  %s7 = inlined_call_operand.hbm [shape: f32[8,128], index: 7, kind: output, shape index: {0}]
  %s8 = inlined_call_operand.hbm [shape: f32[8,8], index: 8, kind: output, shape index: {1}]
  %9 = xla_tuple %s7, %s8
  %s10 = sld [smem:[#allocation0]]
  $region62: #{tpu_custom_call.1} parent=0
    _
  %s12 = ssub.s32 1, %s10
  %s13 = scalar_select 0, %s12, %s10
  $region1: #{tpu_custom_call.1} parent=0
    #allocation2 [shape = 'u8[4096]{0}', space=vmem, size = 0x1000, scoped, tag = 'input window, operand 0, single buffered']
    #allocation3 [shape = 's32[1]{0}', space=sflag, size = 0x4, scoped, tag = 'scoped memory for tpu_custom_call.1']
    #allocation4 [shape = 's32[1]{0}', space=sflag, size = 0x4, scoped, tag = 'scoped memory for tpu_custom_call.1']
    #allocation5 [shape = 'u8[32768]{0}', space=vmem, size = 0x8000, scoped, tag = 'input window, operand 1, single buffered']
    #allocation6 [shape = 's32[1]{0}', space=sflag, size = 0x4, scoped, tag = 'scoped memory for tpu_custom_call.1']
    #allocation7 [shape = 'u8[65536]{0}', space=vmem, size = 0x10000, scoped, tag = 'input window, operand 2, single buffered']
    #allocation8 [shape = 'u8[65536]{0}', space=vmem, size = 0x10000, scoped, tag = 'input window, operand 4, single buffered']
    #allocation9 [shape = 's32[1]{0}', space=sflag, size = 0x4, scoped, tag = 'scoped memory for tpu_custom_call.1']
    #allocation10 [shape = 'u8[4096]{0}', space=vmem, size = 0x1000, scoped, tag = 'output window, operand 0, single buffered']
    #allocation11 [shape = 'u8[4096]{0}', space=vmem, size = 0x1000, scoped, tag = 'output window, operand 1, single buffered']
    #allocation12 [shape = 's32[1]{0}', space=sflag, size = 0x4, scoped, tag = 'scoped memory for tpu_custom_call.1']
    %14 = vsyncpa [#allocation3], 0
    %15 = vsyncpa [#allocation6], 0
    %16 = vsyncpa [#allocation9], 0
    %17 = vsyncpa [#allocation4], 0
    %18 = vsyncpa [#allocation12], 0
    // Predicated region
    $region2: #{tpu_custom_call.1} parent=1 // pred_check
      _
    $region3: #{tpu_custom_call.1} parent=1 // pred_check_branch
      %20 = sbr.rel (0) target = $region5
    $region4: #{tpu_custom_call.1} parent=1 // pred_region
      %s22 = ssub.s32 128, 128
      %23 = vsyncadd [#allocation3], %s22
      %s25 = sshll.u32 [#allocation2], 4
      %s26 = int_to_ptr.vmem [resolvable:$true] %s25
      %28 = dma.hbm_to_vmem [thread:$0]  %s0, 128, %s26, [#allocation3]
    $region5: #{tpu_custom_call.1} parent=1 // pred_fallthru
      _
    // Predicated region
    $region6: #{tpu_custom_call.1} parent=1 // pred_check
      _
    $region7: #{tpu_custom_call.1} parent=1 // pred_check_branch
      %30 = sbr.rel (0) target = $region9
    $region8: #{tpu_custom_call.1} parent=1 // pred_region
      %s32 = ssub.s32 1024, 1024
      %33 = vsyncadd [#allocation6], %s32
      %s34 = sshll.u32 [#allocation5], 4
      %s35 = int_to_ptr.vmem [resolvable:$true] %s34
      %40 = dma.hbm_to_vmem [thread:$0]  %s1, 1024, %s35, [#allocation6], 128, 128, 8
    $region9: #{tpu_custom_call.1} parent=1 // pred_fallthru
      _
    // Predicated region
    $region10: #{tpu_custom_call.1} parent=1 // pred_check
      _
    $region11: #{tpu_custom_call.1} parent=1 // pred_check_branch
      %42 = sbr.rel (0) target = $region13
    $region12: #{tpu_custom_call.1} parent=1 // pred_region
      %s44 = ssub.s32 2048, 2048
      %45 = vsyncadd [#allocation6], %s44
      %s46 = sshll.u32 [#allocation7], 4
      %s47 = int_to_ptr.vmem [resolvable:$true] %s46
      %52 = dma.hbm_to_vmem [thread:$0]  %s2, 2048, %s47, [#allocation6], 128, 128, 8
    $region13: #{tpu_custom_call.1} parent=1 // pred_fallthru
      _
    // Predicated region
    $region14: #{tpu_custom_call.1} parent=1 // pred_check
      _
    $region15: #{tpu_custom_call.1} parent=1 // pred_check_branch
      %54 = sbr.rel (0) target = $region17
    $region16: #{tpu_custom_call.1} parent=1 // pred_region
      _
    $region17: #{tpu_custom_call.1} parent=1 // pred_fallthru
      _
    // Predicated region
    $region18: #{tpu_custom_call.1} parent=1 // pred_check
      _
    $region19: #{tpu_custom_call.1} parent=1 // pred_check_branch
      %56 = sbr.rel (0) target = $region21
    $region20: #{tpu_custom_call.1} parent=1 // pred_region
      %s58 = ssub.s32 2048, 2048
      %59 = vsyncadd [#allocation9], %s58
      %s60 = sshll.u32 [#allocation8], 4
      %s61 = int_to_ptr.vmem [resolvable:$true] %s60
      %66 = dma.hbm_to_vmem [thread:$0]  %s4, 2048, %s61, [#allocation9], 128, 128, 8
    $region21: #{tpu_custom_call.1} parent=1 // pred_fallthru
      _
    // Predicated region
    $region22: #{tpu_custom_call.1} parent=1 // pred_check
      _
    $region23: #{tpu_custom_call.1} parent=1 // pred_check_branch
      %68 = sbr.rel (0) target = $region25
    $region24: #{tpu_custom_call.1} parent=1 // pred_region
      _
    $region25: #{tpu_custom_call.1} parent=1 // pred_fallthru
      _
    // Predicated region
    $region26: #{tpu_custom_call.1} parent=1 // pred_check
      _
    $region27: #{tpu_custom_call.1} parent=1 // pred_check_branch
      %70 = sbr.rel (0) target = $region29
    $region28: #{tpu_custom_call.1} parent=1 // pred_region
      _
    $region29: #{tpu_custom_call.1} parent=1 // pred_fallthru
      _
    // Predicated region
    $region30: #{tpu_custom_call.1} parent=1 // pred_check
      _
    $region31: #{tpu_custom_call.1} parent=1 // pred_check_branch
      %72 = sbr.rel (0) target = $region33
    $region32: #{tpu_custom_call.1} parent=1 // pred_region
      %73 = dma.done [#allocation3], 128
    $region33: #{tpu_custom_call.1} parent=1 // pred_fallthru
      _
    // Predicated region
    $region34: #{tpu_custom_call.1} parent=1 // pred_check
      _
    $region35: #{tpu_custom_call.1} parent=1 // pred_check_branch
      %75 = sbr.rel (0) target = $region37
    $region36: #{tpu_custom_call.1} parent=1 // pred_region
      %76 = dma.done [#allocation6], 1024
    $region37: #{tpu_custom_call.1} parent=1 // pred_fallthru
      _
    // Predicated region
    $region38: #{tpu_custom_call.1} parent=1 // pred_check
      _
    $region39: #{tpu_custom_call.1} parent=1 // pred_check_branch
      %78 = sbr.rel (0) target = $region41
    $region40: #{tpu_custom_call.1} parent=1 // pred_region
      %79 = dma.done [#allocation6], 2048
    $region41: #{tpu_custom_call.1} parent=1 // pred_fallthru
      _
    // Predicated region
    $region42: #{tpu_custom_call.1} parent=1 // pred_check
      _
    $region43: #{tpu_custom_call.1} parent=1 // pred_check_branch
      %81 = sbr.rel (0) target = $region45
    $region44: #{tpu_custom_call.1} parent=1 // pred_region
      %82 = dma.done [#allocation9], 2048
    $region45: #{tpu_custom_call.1} parent=1 // pred_fallthru
      _
    %v83 = vld [vmem:[#allocation2] sm:$0xff]
    %v84 = vld [vmem:[#allocation5] sm:$0xff]
    %v85 = vld [vmem:[#allocation5 + $0x8] sm:$0xff]
    %v86 = vld [vmem:[#allocation5 + $0x10] sm:$0xff]
    %v87 = vld [vmem:[#allocation5 + $0x18] sm:$0xff]
    %v88 = vld [vmem:[#allocation5 + $0x20] sm:$0xff]
    %v89 = vld [vmem:[#allocation5 + $0x28] sm:$0xff]
    %v90 = vld [vmem:[#allocation5 + $0x30] sm:$0xff]
    %v91 = vld [vmem:[#allocation5 + $0x38] sm:$0xff]
    %v92 = vld [vmem:[#allocation7] sm:$0xff]
    %v93 = vld [vmem:[#allocation7 + $0x8] sm:$0xff]
    %v94 = vld [vmem:[#allocation7 + $0x10] sm:$0xff]
    %v95 = vld [vmem:[#allocation7 + $0x18] sm:$0xff]
    %v96 = vld [vmem:[#allocation7 + $0x20] sm:$0xff]
    %v97 = vld [vmem:[#allocation7 + $0x28] sm:$0xff]
    %v98 = vld [vmem:[#allocation7 + $0x30] sm:$0xff]
    %v99 = vld [vmem:[#allocation7 + $0x38] sm:$0xff]
    %v100 = vld [vmem:[#allocation7 + $0x40] sm:$0xff]
    %v101 = vld [vmem:[#allocation7 + $0x48] sm:$0xff]
    %v102 = vld [vmem:[#allocation7 + $0x50] sm:$0xff]
    %v103 = vld [vmem:[#allocation7 + $0x58] sm:$0xff]
    %v104 = vld [vmem:[#allocation7 + $0x60] sm:$0xff]
    %v105 = vld [vmem:[#allocation7 + $0x68] sm:$0xff]
    %v106 = vld [vmem:[#allocation7 + $0x70] sm:$0xff]
    %v107 = vld [vmem:[#allocation7 + $0x78] sm:$0xff]
    %v108 = vld [vmem:[%s3] sm:$0x1]
    %v110 = vlaneseq
    %v111 = vshrl.u32 %v110, 7
    %v112 = vsub.s32 0, %v111
    %v113 = vrot.slane %v108, %v112
    %115 = vmatprep.subr.mxu0 0.0
    %116 = vmatpush1.msra.mxu0 %v107
    %117 = vmatprep.subr.mxu0 0.0
    %118 = vmatpush1.msra.mxu0 %v106
    %119 = vmatprep.subr.mxu0 0.0
    %120 = vmatpush1.msra.mxu0 %v105
    %121 = vmatprep.subr.mxu0 0.0
    %122 = vmatpush1.msra.mxu0 %v104
    %123 = vmatprep.subr.mxu0 0.0
    %124 = vmatpush1.msra.mxu0 %v103
    %125 = vmatprep.subr.mxu0 0.0
    %126 = vmatpush1.msra.mxu0 %v102
    %127 = vmatprep.subr.mxu0 0.0
    %128 = vmatpush1.msra.mxu0 %v101
    %129 = vmatprep.subr.mxu0 0.0
    %130 = vmatpush1.msra.mxu0 %v100
    %131 = vmatprep.subr.mxu0 0.0
    %132 = vmatpush1.msra.mxu0 %v99
    %133 = vmatprep.subr.mxu0 0.0
    %134 = vmatpush1.msra.mxu0 %v98
    %135 = vmatprep.subr.mxu0 0.0
    %136 = vmatpush1.msra.mxu0 %v97
    %137 = vmatprep.subr.mxu0 0.0
    %138 = vmatpush1.msra.mxu0 %v96
    %139 = vmatprep.subr.mxu0 0.0
    %140 = vmatpush1.msra.mxu0 %v95
    %141 = vmatprep.subr.mxu0 0.0
    %142 = vmatpush1.msra.mxu0 %v94
    %143 = vmatprep.subr.mxu0 0.0
    %144 = vmatpush1.msra.mxu0 %v93
    %145 = vmatprep.subr.mxu0 0.0
    %146 = vmatpush1.msra.mxu0 %v92
    %147 = vmatprep.subr.mxu0 0.0
    %148 = vmatpush2.msra.mxu0 0.0
    %149 = vmatprep.subr.mxu0 0.0
    %150 = vmatpush2.msra.mxu0 0.0
    %151 = vmatprep.subr.mxu0 0.0
    %152 = vmatpush2.msra.mxu0 0.0
    %153 = vmatprep.subr.mxu0 0.0
    %154 = vmatpush2.msra.mxu0 0.0
    %155 = vmatprep.subr.mxu0 0.0
    %156 = vmatpush2.msra.mxu0 0.0
    %157 = vmatprep.subr.mxu0 0.0
    %158 = vmatpush2.msra.mxu0 0.0
    %159 = vmatprep.subr.mxu0 0.0
    %160 = vmatpush2.msra.mxu0 0.0
    %161 = vmatprep.subr.mxu0 0.0
    %162 = vmatpush2.msra.mxu0 0.0
    %163 = vmatprep.subr.mxu0 0.0
    %164 = vmatpush2.msra.mxu0 0.0
    %165 = vmatprep.subr.mxu0 0.0
    %166 = vmatpush2.msra.mxu0 0.0
    %167 = vmatprep.subr.mxu0 0.0
    %168 = vmatpush2.msra.mxu0 0.0
    %169 = vmatprep.subr.mxu0 0.0
    %170 = vmatpush2.msra.mxu0 0.0
    %171 = vmatprep.subr.mxu0 0.0
    %172 = vmatpush2.msra.mxu0 0.0
    %173 = vmatprep.subr.mxu0 0.0
    %174 = vmatpush2.msra.mxu0 0.0
    %175 = vmatprep.subr.mxu0 0.0
    %176 = vmatpush2.msra.mxu0 0.0
    %177 = vmatprep.subr.mxu0 0.0
    %178 = vmatpush2.msra.mxu0 0.0
    %179 = vmatprep.mubr.f32.mxu0 0.0
    %180 = vmatmul.mubr.f32.gmra.mxu0 %v83
    %v181 = vpop.f32.mrf.mxu0
    %v182 = vadd.f32 %v113, %v181
    %v183 = vpop.f32.mrf.mxu0
    %184 = vdwg.mxu0
    %v185 = vld [vmem:[#allocation8] sm:$0xff]
    %v186 = vld [vmem:[#allocation8 + $0x8] sm:$0xff]
    %v187 = vld [vmem:[#allocation8 + $0x10] sm:$0xff]
    %v188 = vld [vmem:[#allocation8 + $0x18] sm:$0xff]
    %v189 = vld [vmem:[#allocation8 + $0x20] sm:$0xff]
    %v190 = vld [vmem:[#allocation8 + $0x28] sm:$0xff]
    %v191 = vld [vmem:[#allocation8 + $0x30] sm:$0xff]
    %v192 = vld [vmem:[#allocation8 + $0x38] sm:$0xff]
    %v193 = vld [vmem:[#allocation8 + $0x40] sm:$0xff]
    %v194 = vld [vmem:[#allocation8 + $0x48] sm:$0xff]
    %v195 = vld [vmem:[#allocation8 + $0x50] sm:$0xff]
    %v196 = vld [vmem:[#allocation8 + $0x58] sm:$0xff]
    %v197 = vld [vmem:[#allocation8 + $0x60] sm:$0xff]
    %v198 = vld [vmem:[#allocation8 + $0x68] sm:$0xff]
    %v199 = vld [vmem:[#allocation8 + $0x70] sm:$0xff]
    %v200 = vld [vmem:[#allocation8 + $0x78] sm:$0xff]
    %v201 = vld [vmem:[%s5] sm:$0x1]
    %v203 = vlaneseq
    %v204 = vshrl.u32 %v203, 7
    %v205 = vsub.s32 0, %v204
    %v206 = vrot.slane %v201, %v205
    %208 = vmatprep.subr.mxu0 0.0
    %209 = vmatpush1.msra.mxu0 %v200
    %210 = vmatprep.subr.mxu0 0.0
    %211 = vmatpush1.msra.mxu0 %v199
    %212 = vmatprep.subr.mxu0 0.0
    %213 = vmatpush1.msra.mxu0 %v198
    %214 = vmatprep.subr.mxu0 0.0
    %215 = vmatpush1.msra.mxu0 %v197
    %216 = vmatprep.subr.mxu0 0.0
    %217 = vmatpush1.msra.mxu0 %v196
    %218 = vmatprep.subr.mxu0 0.0
    %219 = vmatpush1.msra.mxu0 %v195
    %220 = vmatprep.subr.mxu0 0.0
    %221 = vmatpush1.msra.mxu0 %v194
    %222 = vmatprep.subr.mxu0 0.0
    %223 = vmatpush1.msra.mxu0 %v193
    %224 = vmatprep.subr.mxu0 0.0
    %225 = vmatpush1.msra.mxu0 %v192
    %226 = vmatprep.subr.mxu0 0.0
    %227 = vmatpush1.msra.mxu0 %v191
    %228 = vmatprep.subr.mxu0 0.0
    %229 = vmatpush1.msra.mxu0 %v190
    %230 = vmatprep.subr.mxu0 0.0
    %231 = vmatpush1.msra.mxu0 %v189
    %232 = vmatprep.subr.mxu0 0.0
    %233 = vmatpush1.msra.mxu0 %v188
    %234 = vmatprep.subr.mxu0 0.0
    %235 = vmatpush1.msra.mxu0 %v187
    %236 = vmatprep.subr.mxu0 0.0
    %237 = vmatpush1.msra.mxu0 %v186
    %238 = vmatprep.subr.mxu0 0.0
    %239 = vmatpush1.msra.mxu0 %v185
    %240 = vmatprep.subr.mxu0 0.0
    %241 = vmatpush2.msra.mxu0 0.0
    %242 = vmatprep.subr.mxu0 0.0
    %243 = vmatpush2.msra.mxu0 0.0
    %244 = vmatprep.subr.mxu0 0.0
    %245 = vmatpush2.msra.mxu0 0.0
    %246 = vmatprep.subr.mxu0 0.0
    %247 = vmatpush2.msra.mxu0 0.0
    %248 = vmatprep.subr.mxu0 0.0
    %249 = vmatpush2.msra.mxu0 0.0
    %250 = vmatprep.subr.mxu0 0.0
    %251 = vmatpush2.msra.mxu0 0.0
    %252 = vmatprep.subr.mxu0 0.0
    %253 = vmatpush2.msra.mxu0 0.0
    %254 = vmatprep.subr.mxu0 0.0
    %255 = vmatpush2.msra.mxu0 0.0
    %256 = vmatprep.subr.mxu0 0.0
    %257 = vmatpush2.msra.mxu0 0.0
    %258 = vmatprep.subr.mxu0 0.0
    %259 = vmatpush2.msra.mxu0 0.0
    %260 = vmatprep.subr.mxu0 0.0
    %261 = vmatpush2.msra.mxu0 0.0
    %262 = vmatprep.subr.mxu0 0.0
    %263 = vmatpush2.msra.mxu0 0.0
    %264 = vmatprep.subr.mxu0 0.0
    %265 = vmatpush2.msra.mxu0 0.0
    %266 = vmatprep.subr.mxu0 0.0
    %267 = vmatpush2.msra.mxu0 0.0
    %268 = vmatprep.subr.mxu0 0.0
    %269 = vmatpush2.msra.mxu0 0.0
    %270 = vmatprep.subr.mxu0 0.0
    %271 = vmatpush2.msra.mxu0 0.0
    %272 = vmatprep.mubr.f32.mxu0 0.0
    %273 = vmatmul.mubr.f32.gmra.mxu0 %v84
    %v274 = vpop.f32.mrf.mxu0
    %v275 = vadd.f32 %v206, %v274
    %v276 = vpop.f32.mrf.mxu0
    %277 = vmatprep.mubr.f32.mxu0 0.0
    %278 = vmatmul.mubr.f32.gmra.mxu0 %v85
    %v279 = vpop.f32.mrf.mxu0
    %v280 = vadd.f32 %v206, %v279
    %v281 = vpop.f32.mrf.mxu0
    %282 = vmatprep.mubr.f32.mxu0 0.0
    %283 = vmatmul.mubr.f32.gmra.mxu0 %v86
    %v284 = vpop.f32.mrf.mxu0
    %v285 = vadd.f32 %v206, %v284
    %v286 = vpop.f32.mrf.mxu0
    %287 = vmatprep.mubr.f32.mxu0 0.0
    %288 = vmatmul.mubr.f32.gmra.mxu0 %v87
    %v289 = vpop.f32.mrf.mxu0
    %v290 = vadd.f32 %v206, %v289
    %v291 = vpop.f32.mrf.mxu0
    %292 = vmatprep.mubr.f32.mxu0 0.0
    %293 = vmatmul.mubr.f32.gmra.mxu0 %v88
    %v294 = vpop.f32.mrf.mxu0
    %v295 = vadd.f32 %v206, %v294
    %v296 = vpop.f32.mrf.mxu0
    %297 = vmatprep.mubr.f32.mxu0 0.0
    %298 = vmatmul.mubr.f32.gmra.mxu0 %v89
    %v299 = vpop.f32.mrf.mxu0
    %v300 = vadd.f32 %v206, %v299
    %v301 = vpop.f32.mrf.mxu0
    %302 = vmatprep.mubr.f32.mxu0 0.0
    %303 = vmatmul.mubr.f32.gmra.mxu0 %v90
    %v304 = vpop.f32.mrf.mxu0
    %v305 = vadd.f32 %v206, %v304
    %v306 = vpop.f32.mrf.mxu0
    %307 = vmatprep.mubr.f32.mxu0 0.0
    %308 = vmatmul.mubr.f32.gmra.mxu0 %v91
    %v309 = vpop.f32.mrf.mxu0
    %v310 = vadd.f32 %v206, %v309
    %v311 = vpop.f32.mrf.mxu0
    %312 = vdwg.mxu0
    %v314 = vcombine.high %v182, %v182
    %v316 = vunpack.c.l.s4 1966171168
    %v317 = vunpack.c.0.s8 %v316
    %v318 = vlaneseq
    %v319 = vshrl.u32 %v318, 7
    %v320 = vsub.s32 %v317, %v319
    %v321 = vrot.slane %v182, %v320
    %v323 = vunpack.c.l.s4 1966171168
    %v324 = vunpack.c.0.s8 %v323
    %v325 = vlaneseq
    %v326 = vshrl.u32 %v325, 7
    %v327 = vsub.s32 %v324, %v326
    %v328 = vrot.slane %v314, %v327
    %v329 = vcombine.high %v321, %v321
    %v330 = vcombine.high %v328, %v328
    %v332 = vunpack.c.l.s4 1966171168
    %v333 = vunpack.c.0.s8 %v332
    %v334 = vlaneseq
    %v335 = vshrl.u32 %v334, 7
    %v336 = vsub.s32 %v333, %v335
    %v337 = vrot.slane %v321, %v336
    %v339 = vunpack.c.l.s4 1966171168
    %v340 = vunpack.c.0.s8 %v339
    %v341 = vlaneseq
    %v342 = vshrl.u32 %v341, 7
    %v343 = vsub.s32 %v340, %v342
    %v344 = vrot.slane %v328, %v343
    %v346 = vunpack.c.l.s4 1966171168
    %v347 = vunpack.c.0.s8 %v346
    %v348 = vlaneseq
    %v349 = vshrl.u32 %v348, 7
    %v350 = vsub.s32 %v347, %v349
    %v351 = vrot.slane %v329, %v350
    %v353 = vunpack.c.l.s4 1966171168
    %v354 = vunpack.c.0.s8 %v353
    %v355 = vlaneseq
    %v356 = vshrl.u32 %v355, 7
    %v357 = vsub.s32 %v354, %v356
    %v358 = vrot.slane %v330, %v357
    %v359 = vcombine.high %v337, %v337
    %v360 = vcombine.high %v344, %v344
    %v361 = vcombine.high %v351, %v351
    %v362 = vcombine.high %v358, %v358
    %v363 = vlaneseq
    %v364 = vshrl.u32 %v363, 7
    %v365 = vsub.s32 0, %v364
    %v366 = vrot.slane %v337, %v365
    %v367 = vlaneseq
    %v368 = vshrl.u32 %v367, 7
    %v369 = vsub.s32 0, %v368
    %v370 = vrot.slane %v351, %v369
    %v371 = vlaneseq
    %v372 = vshrl.u32 %v371, 7
    %v373 = vsub.s32 0, %v372
    %v374 = vrot.slane %v359, %v373
    %v375 = vlaneseq
    %v376 = vshrl.u32 %v375, 7
    %v377 = vsub.s32 0, %v376
    %v378 = vrot.slane %v361, %v377
    %v379 = vlaneseq
    %v380 = vshrl.u32 %v379, 7
    %v381 = vsub.s32 0, %v380
    %v382 = vrot.slane %v344, %v381
    %v383 = vlaneseq
    %v384 = vshrl.u32 %v383, 7
    %v385 = vsub.s32 0, %v384
    %v386 = vrot.slane %v358, %v385
    %v387 = vlaneseq
    %v388 = vshrl.u32 %v387, 7
    %v389 = vsub.s32 0, %v388
    %v390 = vrot.slane %v360, %v389
    %v391 = vlaneseq
    %v392 = vshrl.u32 %v391, 7
    %v393 = vsub.s32 0, %v392
    %v394 = vrot.slane %v362, %v393
    %v403 = vadd.f32 %v275, %v366
    %v404 = vadd.f32 %v280, %v370
    %v405 = vadd.f32 %v285, %v374
    %v406 = vadd.f32 %v290, %v378
    %v407 = vadd.f32 %v295, %v382
    %v408 = vadd.f32 %v300, %v386
    %v409 = vadd.f32 %v305, %v390
    %v410 = vadd.f32 %v310, %v394
    %v411 = vtanh.pop %v403
    %v412 = vtanh.pop %v404
    %v413 = vtanh.pop %v405
    %v414 = vtanh.pop %v406
    %v415 = vtanh.pop %v407
    %v416 = vtanh.pop %v408
    %v417 = vtanh.pop %v409
    %v418 = vtanh.pop %v410
    %v419 = vld [vmem:[%s6] sm:$0x1]
    %v421 = vlaneseq
    %v422 = vshrl.u32 %v421, 7
    %v423 = vsub.s32 0, %v422
    %v424 = vrot.slane %v419, %v423
    %v426 = vmul.f32 %v411, %v424
    %v427 = vmul.f32 %v412, %v424
    %v428 = vmul.f32 %v413, %v424
    %v429 = vmul.f32 %v414, %v424
    %v430 = vmul.f32 %v415, %v424
    %v431 = vmul.f32 %v416, %v424
    %v432 = vmul.f32 %v417, %v424
    %v433 = vmul.f32 %v418, %v424
    %434 = vadd.xlane.f32.xlu0 %v426
    %v435 = vpop.xlane.xlu0 %434
    %436 = vadd.xlane.f32.xlu0 %v427
    %v437 = vpop.xlane.xlu0 %436
    %438 = vadd.xlane.f32.xlu0 %v428
    %v439 = vpop.xlane.xlu0 %438
    %440 = vadd.xlane.f32.xlu0 %v429
    %v441 = vpop.xlane.xlu0 %440
    %442 = vadd.xlane.f32.xlu0 %v430
    %v443 = vpop.xlane.xlu0 %442
    %444 = vadd.xlane.f32.xlu0 %v431
    %v445 = vpop.xlane.xlu0 %444
    %446 = vadd.xlane.f32.xlu0 %v432
    %v447 = vpop.xlane.xlu0 %446
    %448 = vadd.xlane.f32.xlu0 %v433
    %v449 = vpop.xlane.xlu0 %448
    %v458 = vlaneseq
    %v459 = vand.u32 %v458, 127
    %v460 = vlaneseq
    %v461 = vshrl.u32 %v460, 7
    %v462 = vsub.s32 %v459, %v461
    %v463 = vrot.slane %v435, %v462
    %v464 = vlaneseq
    %v465 = vshrl.u32 %v464, 7
    %v466 = vsub.s32 %v459, %v465
    %v467 = vrot.slane %v437, %v466
    %v468 = vlaneseq
    %v469 = vshrl.u32 %v468, 7
    %v470 = vsub.s32 %v459, %v469
    %v471 = vrot.slane %v439, %v470
    %v472 = vlaneseq
    %v473 = vshrl.u32 %v472, 7
    %v474 = vsub.s32 %v459, %v473
    %v475 = vrot.slane %v441, %v474
    %v476 = vlaneseq
    %v477 = vshrl.u32 %v476, 7
    %v478 = vsub.s32 %v459, %v477
    %v479 = vrot.slane %v443, %v478
    %v480 = vlaneseq
    %v481 = vshrl.u32 %v480, 7
    %v482 = vsub.s32 %v459, %v481
    %v483 = vrot.slane %v445, %v482
    %v484 = vlaneseq
    %v485 = vshrl.u32 %v484, 7
    %v486 = vsub.s32 %v459, %v485
    %v487 = vrot.slane %v447, %v486
    %v488 = vlaneseq
    %v489 = vshrl.u32 %v488, 7
    %v490 = vsub.s32 %v459, %v489
    %v491 = vrot.slane %v449, %v490
    %vm492 = vcmask 1041409
    %v493 = vsel %vm492, %v467, %v463
    %vm494 = vcmask 1042434
    %v495 = vsel %vm494, %v471, %v493
    %vm496 = vcmask 1043459
    %v497 = vsel %vm496, %v475, %v495
    %vm498 = vcmask 1044484
    %v499 = vsel %vm498, %v479, %v497
    %vm500 = vcmask 1045509
    %v501 = vsel %vm500, %v483, %v499
    %vm502 = vcmask 1046534
    %v503 = vsel %vm502, %v487, %v501
    %vm504 = vcmask 1047559
    %v505 = vsel %vm504, %v491, %v503
    %vm507 = vcmask 64512
    %v508 = vsel %vm507, %v505, -inf
    %509 = vmax.xlane.f32.xlu0 %v508
    %v510 = vpop.xlane.xlu0 %509
    %v512 = vlaneseq
    %v513 = vshrl.u32 %v512, 7
    %v514 = vsub.s32 0, %v513
    %v515 = vrot.slane %v510, %v514
    %v516 = vlaneseq
    %v517 = vshrl.u32 %v516, 7
    %v518 = vsub.s32 1, %v517
    %v519 = vrot.slane %v510, %v518
    %v520 = vlaneseq
    %v521 = vshrl.u32 %v520, 7
    %v522 = vsub.s32 2, %v521
    %v523 = vrot.slane %v510, %v522
    %v524 = vlaneseq
    %v525 = vshrl.u32 %v524, 7
    %v526 = vsub.s32 3, %v525
    %v527 = vrot.slane %v510, %v526
    %v528 = vlaneseq
    %v529 = vshrl.u32 %v528, 7
    %v530 = vsub.s32 4, %v529
    %v531 = vrot.slane %v510, %v530
    %v532 = vlaneseq
    %v533 = vshrl.u32 %v532, 7
    %v534 = vsub.s32 5, %v533
    %v535 = vrot.slane %v510, %v534
    %v536 = vlaneseq
    %v537 = vshrl.u32 %v536, 7
    %v538 = vsub.s32 6, %v537
    %v539 = vrot.slane %v510, %v538
    %v540 = vlaneseq
    %v541 = vshrl.u32 %v540, 7
    %v542 = vsub.s32 7, %v541
    %v543 = vrot.slane %v510, %v542
    %v552 = vsub.f32 %v435, %v515
    %v553 = vsub.f32 %v437, %v519
    %v554 = vsub.f32 %v439, %v523
    %v555 = vsub.f32 %v441, %v527
    %v556 = vsub.f32 %v443, %v531
    %v557 = vsub.f32 %v445, %v535
    %v558 = vsub.f32 %v447, %v539
    %v559 = vsub.f32 %v449, %v543
    %v560 = vmul.f32 %v552, 1.442695
    %v561 = vpow.pop %v560
    %v562 = vmul.f32 %v553, 1.442695
    %v563 = vpow.pop %v562
    %v564 = vmul.f32 %v554, 1.442695
    %v565 = vpow.pop %v564
    %v566 = vmul.f32 %v555, 1.442695
    %v567 = vpow.pop %v566
    %v568 = vmul.f32 %v556, 1.442695
    %v569 = vpow.pop %v568
    %v570 = vmul.f32 %v557, 1.442695
    %v571 = vpow.pop %v570
    %v572 = vmul.f32 %v558, 1.442695
    %v573 = vpow.pop %v572
    %v574 = vmul.f32 %v559, 1.442695
    %v575 = vpow.pop %v574
    %584 = vset.pattern.permute.xlu0 0
    %585 = vperm.xlu0 %584, %v561
    %v586 = vpop.permute.xlu0 %585
    %587 = vset.pattern.permute.xlu0 0
    %588 = vperm.xlu0 %587, %v563
    %v589 = vpop.permute.xlu0 %588
    %590 = vset.pattern.permute.xlu0 0
    %591 = vperm.xlu0 %590, %v565
    %v592 = vpop.permute.xlu0 %591
    %593 = vset.pattern.permute.xlu0 0
    %594 = vperm.xlu0 %593, %v567
    %v595 = vpop.permute.xlu0 %594
    %596 = vset.pattern.permute.xlu0 0
    %597 = vperm.xlu0 %596, %v569
    %v598 = vpop.permute.xlu0 %597
    %599 = vset.pattern.permute.xlu0 0
    %600 = vperm.xlu0 %599, %v571
    %v601 = vpop.permute.xlu0 %600
    %602 = vset.pattern.permute.xlu0 0
    %603 = vperm.xlu0 %602, %v573
    %v604 = vpop.permute.xlu0 %603
    %605 = vset.pattern.permute.xlu0 0
    %606 = vperm.xlu0 %605, %v575
    %v607 = vpop.permute.xlu0 %606
    %v608 = vlaneseq
    %v609 = vshrl.u32 %v608, 7
    %v610 = vsub.s32 %v459, %v609
    %v611 = vrot.slane %v586, %v610
    %v612 = vlaneseq
    %v613 = vshrl.u32 %v612, 7
    %v614 = vsub.s32 %v459, %v613
    %v615 = vrot.slane %v589, %v614
    %v616 = vlaneseq
    %v617 = vshrl.u32 %v616, 7
    %v618 = vsub.s32 %v459, %v617
    %v619 = vrot.slane %v592, %v618
    %v620 = vlaneseq
    %v621 = vshrl.u32 %v620, 7
    %v622 = vsub.s32 %v459, %v621
    %v623 = vrot.slane %v595, %v622
    %v624 = vlaneseq
    %v625 = vshrl.u32 %v624, 7
    %v626 = vsub.s32 %v459, %v625
    %v627 = vrot.slane %v598, %v626
    %v628 = vlaneseq
    %v629 = vshrl.u32 %v628, 7
    %v630 = vsub.s32 %v459, %v629
    %v631 = vrot.slane %v601, %v630
    %v632 = vlaneseq
    %v633 = vshrl.u32 %v632, 7
    %v634 = vsub.s32 %v459, %v633
    %v635 = vrot.slane %v604, %v634
    %v636 = vlaneseq
    %v637 = vshrl.u32 %v636, 7
    %v638 = vsub.s32 %v459, %v637
    %v639 = vrot.slane %v607, %v638
    %v640 = vsel %vm492, %v615, %v611
    %v641 = vsel %vm494, %v619, %v640
    %v642 = vsel %vm496, %v623, %v641
    %v643 = vsel %vm498, %v627, %v642
    %v644 = vsel %vm500, %v631, %v643
    %v645 = vsel %vm502, %v635, %v644
    %v646 = vsel %vm504, %v639, %v645
    %v648 = vsel %vm507, %v646, 0.0
    %649 = vadd.xlane.f32.xlu0 %v648
    %v650 = vpop.xlane.xlu0 %649
    %v652 = vlaneseq
    %v653 = vshrl.u32 %v652, 7
    %v654 = vsub.s32 0, %v653
    %v655 = vrot.slane %v650, %v654
    %v656 = vlaneseq
    %v657 = vshrl.u32 %v656, 7
    %v658 = vsub.s32 1, %v657
    %v659 = vrot.slane %v650, %v658
    %v660 = vlaneseq
    %v661 = vshrl.u32 %v660, 7
    %v662 = vsub.s32 2, %v661
    %v663 = vrot.slane %v650, %v662
    %v664 = vlaneseq
    %v665 = vshrl.u32 %v664, 7
    %v666 = vsub.s32 3, %v665
    %v667 = vrot.slane %v650, %v666
    %v668 = vlaneseq
    %v669 = vshrl.u32 %v668, 7
    %v670 = vsub.s32 4, %v669
    %v671 = vrot.slane %v650, %v670
    %v672 = vlaneseq
    %v673 = vshrl.u32 %v672, 7
    %v674 = vsub.s32 5, %v673
    %v675 = vrot.slane %v650, %v674
    %v676 = vlaneseq
    %v677 = vshrl.u32 %v676, 7
    %v678 = vsub.s32 6, %v677
    %v679 = vrot.slane %v650, %v678
    %v680 = vlaneseq
    %v681 = vshrl.u32 %v680, 7
    %v682 = vsub.s32 7, %v681
    %v683 = vrot.slane %v650, %v682
    %v692 = vrcp.pop %v655
    %v693 = vmul.f32 %v561, %v692
    %v694 = vrcp.pop %v659
    %v695 = vmul.f32 %v563, %v694
    %v696 = vrcp.pop %v663
    %v697 = vmul.f32 %v565, %v696
    %v698 = vrcp.pop %v667
    %v699 = vmul.f32 %v567, %v698
    %v700 = vrcp.pop %v671
    %v701 = vmul.f32 %v569, %v700
    %v702 = vrcp.pop %v675
    %v703 = vmul.f32 %v571, %v702
    %v704 = vrcp.pop %v679
    %v705 = vmul.f32 %v573, %v704
    %v706 = vrcp.pop %v683
    %v707 = vmul.f32 %v575, %v706
    %709 = vset.pattern.permute.xlu0 0
    %710 = vperm.xlu0 %709, %v693
    %v711 = vpop.permute.xlu0 %710
    %714 = vset.pattern.permute.xlu0 0
    %715 = vperm.xlu0 %714, %v695
    %v716 = vpop.permute.xlu0 %715
    %719 = vset.pattern.permute.xlu0 0
    %720 = vperm.xlu0 %719, %v697
    %v721 = vpop.permute.xlu0 %720
    %724 = vset.pattern.permute.xlu0 0
    %725 = vperm.xlu0 %724, %v699
    %v726 = vpop.permute.xlu0 %725
    %729 = vset.pattern.permute.xlu0 0
    %730 = vperm.xlu0 %729, %v701
    %v731 = vpop.permute.xlu0 %730
    %734 = vset.pattern.permute.xlu0 0
    %735 = vperm.xlu0 %734, %v703
    %v736 = vpop.permute.xlu0 %735
    %739 = vset.pattern.permute.xlu0 0
    %740 = vperm.xlu0 %739, %v705
    %v741 = vpop.permute.xlu0 %740
    %744 = vset.pattern.permute.xlu0 0
    %745 = vperm.xlu0 %744, %v707
    %v746 = vpop.permute.xlu0 %745
    %v748 = vmul.f32 %v275, %v711
    %v749 = vmul.f32 %v280, %v716
    %v750 = vmul.f32 %v285, %v721
    %v751 = vmul.f32 %v290, %v726
    %v752 = vmul.f32 %v295, %v731
    %v753 = vmul.f32 %v300, %v736
    %v754 = vmul.f32 %v305, %v741
    %v755 = vmul.f32 %v310, %v746
    %v756 = vrot.slane %v748, 4
    %v757 = vadd.f32 %v748, %v756
    %v758 = vrot.slane %v757, 2
    %v759 = vadd.f32 %v757, %v758
    %v760 = vrot.slane %v759, 1
    %v761 = vadd.f32 %v759, %v760
    %v762 = vrot.slane %v749, 4
    %v763 = vadd.f32 %v749, %v762
    %v764 = vrot.slane %v763, 2
    %v765 = vadd.f32 %v763, %v764
    %v766 = vrot.slane %v765, 1
    %v767 = vadd.f32 %v765, %v766
    %v768 = vrot.slane %v750, 4
    %v769 = vadd.f32 %v750, %v768
    %v770 = vrot.slane %v769, 2
    %v771 = vadd.f32 %v769, %v770
    %v772 = vrot.slane %v771, 1
    %v773 = vadd.f32 %v771, %v772
    %v774 = vrot.slane %v751, 4
    %v775 = vadd.f32 %v751, %v774
    %v776 = vrot.slane %v775, 2
    %v777 = vadd.f32 %v775, %v776
    %v778 = vrot.slane %v777, 1
    %v779 = vadd.f32 %v777, %v778
    %v780 = vrot.slane %v752, 4
    %v781 = vadd.f32 %v752, %v780
    %v782 = vrot.slane %v781, 2
    %v783 = vadd.f32 %v781, %v782
    %v784 = vrot.slane %v783, 1
    %v785 = vadd.f32 %v783, %v784
    %v786 = vrot.slane %v753, 4
    %v787 = vadd.f32 %v753, %v786
    %v788 = vrot.slane %v787, 2
    %v789 = vadd.f32 %v787, %v788
    %v790 = vrot.slane %v789, 1
    %v791 = vadd.f32 %v789, %v790
    %v792 = vrot.slane %v754, 4
    %v793 = vadd.f32 %v754, %v792
    %v794 = vrot.slane %v793, 2
    %v795 = vadd.f32 %v793, %v794
    %v796 = vrot.slane %v795, 1
    %v797 = vadd.f32 %v795, %v796
    %v798 = vrot.slane %v755, 4
    %v799 = vadd.f32 %v755, %v798
    %v800 = vrot.slane %v799, 2
    %v801 = vadd.f32 %v799, %v800
    %v802 = vrot.slane %v801, 1
    %v803 = vadd.f32 %v801, %v802
    %v812 = vsel %vm492, %v767, %v761
    %v813 = vsel %vm494, %v773, %v812
    %v814 = vsel %vm496, %v779, %v813
    %v815 = vsel %vm498, %v785, %v814
    %v816 = vsel %vm500, %v791, %v815
    %v817 = vsel %vm502, %v797, %v816
    %v818 = vsel %vm504, %v803, %v817
    %820 = vst [vmem:[#allocation10] sm:$0xff] %v818
    %v821 = vlaneseq
    %v822 = vshrl.u32 %v821, 7
    %v823 = vsub.s32 %v459, %v822
    %v824 = vrot.slane %v711, %v823
    %v825 = vlaneseq
    %v826 = vshrl.u32 %v825, 7
    %v827 = vsub.s32 %v459, %v826
    %v828 = vrot.slane %v716, %v827
    %v829 = vlaneseq
    %v830 = vshrl.u32 %v829, 7
    %v831 = vsub.s32 %v459, %v830
    %v832 = vrot.slane %v721, %v831
    %v833 = vlaneseq
    %v834 = vshrl.u32 %v833, 7
    %v835 = vsub.s32 %v459, %v834
    %v836 = vrot.slane %v726, %v835
    %v837 = vlaneseq
    %v838 = vshrl.u32 %v837, 7
    %v839 = vsub.s32 %v459, %v838
    %v840 = vrot.slane %v731, %v839
    %v841 = vlaneseq
    %v842 = vshrl.u32 %v841, 7
    %v843 = vsub.s32 %v459, %v842
    %v844 = vrot.slane %v736, %v843
    %v845 = vlaneseq
    %v846 = vshrl.u32 %v845, 7
    %v847 = vsub.s32 %v459, %v846
    %v848 = vrot.slane %v741, %v847
    %v849 = vlaneseq
    %v850 = vshrl.u32 %v849, 7
    %v851 = vsub.s32 %v459, %v850
    %v852 = vrot.slane %v746, %v851
    %v853 = vsel %vm492, %v828, %v824
    %v854 = vsel %vm494, %v832, %v853
    %v855 = vsel %vm496, %v836, %v854
    %v856 = vsel %vm498, %v840, %v855
    %v857 = vsel %vm500, %v844, %v856
    %v858 = vsel %vm502, %v848, %v857
    %v859 = vsel %vm504, %v852, %v858
    %861 = vst.msk [vmem:[#allocation11] sm:$0xff] %vm507, %v859
    // Predicated region
    $region46: #{tpu_custom_call.1} parent=1 // pred_check
      _
    $region47: #{tpu_custom_call.1} parent=1 // pred_check_branch
      %863 = sbr.rel (0) target = $region49
    $region48: #{tpu_custom_call.1} parent=1 // pred_region
      %s865 = ssub.s32 128, 128
      %866 = vsyncadd [#allocation4], %s865
      %s868 = sshll.u32 [#allocation10], 4
      %s869 = int_to_ptr.vmem [resolvable:$true] %s868
      %871 = dma.vmem_to_hbm [thread:$0]  %s869, 128, %s7, [#allocation4]
    $region49: #{tpu_custom_call.1} parent=1 // pred_fallthru
      _
    // Predicated region
    $region50: #{tpu_custom_call.1} parent=1 // pred_check
      _
    $region51: #{tpu_custom_call.1} parent=1 // pred_check_branch
      %873 = sbr.rel (0) target = $region53
    $region52: #{tpu_custom_call.1} parent=1 // pred_region
      %s875 = ssub.s32 128, 128
      %876 = vsyncadd [#allocation12], %s875
      %s878 = sshll.u32 [#allocation11], 4
      %s879 = int_to_ptr.vmem [resolvable:$true] %s878
      %881 = dma.vmem_to_hbm [thread:$0]  %s879, 128, %s8, [#allocation12]
    $region53: #{tpu_custom_call.1} parent=1 // pred_fallthru
      _
    // Predicated region
    $region54: #{tpu_custom_call.1} parent=1 // pred_check
      _
    $region55: #{tpu_custom_call.1} parent=1 // pred_check_branch
      %883 = sbr.rel (0) target = $region57
    $region56: #{tpu_custom_call.1} parent=1 // pred_region
      %884 = dma.done [#allocation4], 128
    $region57: #{tpu_custom_call.1} parent=1 // pred_fallthru
      _
    // Predicated region
    $region58: #{tpu_custom_call.1} parent=1 // pred_check
      _
    $region59: #{tpu_custom_call.1} parent=1 // pred_check_branch
      %886 = sbr.rel (0) target = $region61
    $region60: #{tpu_custom_call.1} parent=1 // pred_region
      %887 = dma.done [#allocation12], 128
    $region61: #{tpu_custom_call.1} parent=1 // pred_fallthru
      _
    %888 = vsyncpa [#allocation3], 1
    %889 = vsyncpa [#allocation6], 1
    %890 = vsyncpa [#allocation9], 1
    %891 = vsyncpa [#allocation4], 1
    %892 = vsyncpa [#allocation12], 1

</llo_original>
